<compile_context>
chip_gen: v7x
topology: tpu7x:2x2x1
jax: 0.10.0
libtpu: 0.0.40
codegen_flags: <defaults>
</compile_context>

<pallas_src>
import functools

import jax
import jax.numpy as jnp
from jax.experimental import pallas as pl
from jax.experimental.pallas import tpu as pltpu


# ---------------------------------------------------------------------------
# Kernel: per-(batch, row-tile) patch projection
#   out = patches @ W_flat + bias
#   patches : (tn, K)    K = C * p * p
#   W_flat  : (K, D)     D = d_model        (resident across all grid steps)
#   bias    : (1, D)
# ---------------------------------------------------------------------------
def _patch_embed_kernel(p_ref, w_ref, b_ref, o_ref):
    patches = p_ref[0]                      # (tn, K)
    w = w_ref[...]                          # (K, D)
    b = b_ref[...]                          # (1, D)
    acc = jnp.dot(patches, w, preferred_element_type=jnp.float32) + b
    o_ref[0] = acc.astype(o_ref.dtype)      # lane-dense (tn, D) store


def patch_embedding(x, conv_w, conv_b, patch_size, *, row_tile=256):
    """x: (B, C, H, W); conv_w: (D, C, p, p); conv_b: (D,) -> (B, N, D)."""
    B, C, H, W = x.shape
    D = conv_w.shape[0]
    p = patch_size
    Hp, Wp = H // p, W // p
    N = Hp * Wp
    K = C * p * p

    # im2col: (B, C, Hp, p, Wp, p) -> (B, Hp, Wp, C, p, p) -> (B, N, K)
    # Pure layout plumbing done by XLA in the wrapper; the compute (matmul)
    # lives in the Pallas kernel.
    patches = (
        x.reshape(B, C, Hp, p, Wp, p)
         .transpose(0, 2, 4, 1, 3, 5)
         .reshape(B, N, K)
    )

    # Flatten the conv weight into "x @ W + b" convention, matching the
    # (c, kh, kw) flattening order used for the patches.
    w_flat = conv_w.transpose(1, 2, 3, 0).reshape(K, D)   # (K, D)
    b_flat = conv_b.reshape(1, D)                          # (1, D)

    # Tile the patch (row) axis; keep the whole K reduction and the full
    # lane-dense D output per step.  Weight/bias use a constant index_map so
    # they stay resident in VMEM across the grid.
    tn = N if N <= row_tile else row_tile
    if N % tn != 0:
        tn = N
    grid = (B, N // tn)

    return pl.pallas_call(
        _patch_embed_kernel,
        out_shape=jax.ShapeDtypeStruct((B, N, D), x.dtype),
        grid_spec=pltpu.PrefetchScalarGridSpec(
            num_scalar_prefetch=0,
            grid=grid,
            in_specs=[
                pl.BlockSpec((1, tn, K), lambda bi, ni: (bi, ni, 0)),
                pl.BlockSpec((K, D), lambda bi, ni: (0, 0)),
                pl.BlockSpec((1, D), lambda bi, ni: (0, 0)),
            ],
            out_specs=pl.BlockSpec((1, tn, D), lambda bi, ni: (bi, ni, 0)),
        ),
        compiler_params=pltpu.CompilerParams(
            dimension_semantics=("parallel", "parallel")),
    )(patches, w_flat, b_flat)


# ---------------------------------------------------------------------------
# Pure-JAX reference (matches the PyTorch module exactly)
# ---------------------------------------------------------------------------
def patch_embedding_ref(x, conv_w, conv_b, patch_size):
    out = jax.lax.conv_general_dilated(
        x, conv_w,
        window_strides=(patch_size, patch_size),
        padding="VALID",
        dimension_numbers=("NCHW", "OIHW", "NCHW"),
    )
    out = out + conv_b.reshape(1, -1, 1, 1)
    B, D, Hp, Wp = out.shape
    return out.reshape(B, D, Hp * Wp).transpose(0, 2, 1)   # (B, N, D)


if __name__ == "__main__":
    # Small shapes consistent with the module: batch=2, channels=4,
    # img 16x16, patch 4 -> 16 patches, d_model=32.
    B, C, H, W = 2, 4, 16, 16
    d_model, patch_size = 32, 4

    key = jax.random.PRNGKey(0)
    kx, kw, kb = jax.random.split(key, 3)

    x = jax.random.normal(kx, (B, C, H, W), dtype=jnp.float32)
    fan_in = C * patch_size * patch_size
    lim = 1.0 / (fan_in ** 0.5)
    conv_w = jax.random.uniform(
        kw, (d_model, C, patch_size, patch_size), jnp.float32, -lim, lim)
    conv_b = jax.random.uniform(kb, (d_model,), jnp.float32, -lim, lim)

    out = patch_embedding(x, conv_w, conv_b, patch_size)
    out = jax.block_until_ready(out)

    ref = patch_embedding_ref(x, conv_w, conv_b, patch_size)
    n_patches = (H // patch_size) * (W // patch_size)
    assert out.shape == (B, n_patches, d_model), out.shape
    assert jnp.allclose(out, ref, atol=1e-5, rtol=1e-5), "mismatch vs reference"

    print("KERNEL_OK")
</pallas_src>

<mosaic_0001>
module attributes {stable_mosaic.version = 11 : i64} {
  func.func @_patch_embed_kernel(%arg0: i32, %arg1: i32, %arg2: memref<1x16x64xf32, #tpu.memory_space<vmem>>, %arg3: memref<64x32xf32, #tpu.memory_space<vmem>>, %arg4: memref<1x32xf32, #tpu.memory_space<vmem>>, %arg5: memref<1x16x32xf32, #tpu.memory_space<vmem>>) attributes {dimension_semantics = [#tpu.dimension_semantics<parallel>, #tpu.dimension_semantics<parallel>], iteration_bounds = array<i64: 2, 1>, scalar_prefetch = 0 : i64, scratch_operands = 0 : i64, tpu.core_type = #tpu.core_type<tc>, window_params = [{transform_indices = @transform_0, window_bounds = array<i64: 1, 16, 64>}, {pipeline_mode = #tpu.pipeline_mode<synchronous>, transform_indices = @transform_1, window_bounds = array<i64: 64, 32>}, {pipeline_mode = #tpu.pipeline_mode<synchronous>, transform_indices = @transform_2, window_bounds = array<i64: 1, 32>}, {transform_indices = @transform_3, window_bounds = array<i64: 1, 16, 32>}]} {
    %c0 = arith.constant 0 : index
    %c0_0 = arith.constant 0 : index
    %c0_1 = arith.constant 0 : index
    %0 = vector.load %arg2[%c0, %c0_0, %c0_1] : memref<1x16x64xf32, #tpu.memory_space<vmem>>, vector<1x16x64xf32>
    %1 = vector.shape_cast %0 : vector<1x16x64xf32> to vector<16x64xf32>
    %c0_2 = arith.constant 0 : index
    %c0_3 = arith.constant 0 : index
    %2 = vector.load %arg3[%c0_2, %c0_3] : memref<64x32xf32, #tpu.memory_space<vmem>>, vector<64x32xf32>
    %c0_4 = arith.constant 0 : index
    %c0_5 = arith.constant 0 : index
    %3 = vector.load %arg4[%c0_4, %c0_5] : memref<1x32xf32, #tpu.memory_space<vmem>>, vector<1x32xf32>
    %cst = arith.constant dense<0.000000e+00> : vector<16x32xf32>
    %4 = tpu.matmul %1, %2, %cst {dimension_numbers = #tpu.dot_dimension_numbers<[1], [0], [0], [1], [0, 0, 1, 1], [], []>} : vector<16x64xf32>, vector<64x32xf32>, vector<16x32xf32> -> vector<16x32xf32>
    %5 = vector.broadcast %3 : vector<1x32xf32> to vector<16x32xf32>
    %6 = arith.addf %4, %5 : vector<16x32xf32>
    %c0_6 = arith.constant 0 : index
    %c0_7 = arith.constant 0 : index
    %c0_8 = arith.constant 0 : index
    %7 = vector.load %arg5[%c0_6, %c0_7, %c0_8] : memref<1x16x32xf32, #tpu.memory_space<vmem>>, vector<1x16x32xf32>
    %8 = vector.shape_cast %7 : vector<1x16x32xf32> to vector<16x32xf32>
    %9 = vector.shape_cast %6 : vector<16x32xf32> to vector<1x16x32xf32>
    tpu.vector_store %arg5[%c0_6, %c0_7, %c0_8], %9 {strides = array<i32>} : memref<1x16x32xf32, #tpu.memory_space<vmem>>, vector<1x16x32xf32>,
    return
  }
  func.func @transform_0(%arg0: i32, %arg1: i32) -> (i32, i32, i32) {
    %c0_i32 = arith.constant 0 : i32
    %c0_i32_0 = arith.constant 0 : i32
    return %arg0, %arg1, %c0_i32 : i32, i32, i32
  }
  func.func @transform_1(%arg0: i32, %arg1: i32) -> (i32, i32) {
    %c0_i32 = arith.constant 0 : i32
    %c0_i32_0 = arith.constant 0 : i32
    %c0_i32_1 = arith.constant 0 : i32
    return %c0_i32, %c0_i32_0 : i32, i32
  }
  func.func @transform_2(%arg0: i32, %arg1: i32) -> (i32, i32) {
    %c0_i32 = arith.constant 0 : i32
    %c0_i32_0 = arith.constant 0 : i32
    %c0_i32_1 = arith.constant 0 : i32
    return %c0_i32, %c0_i32_0 : i32, i32
  }
  func.func @transform_3(%arg0: i32, %arg1: i32) -> (i32, i32, i32) {
    %c0_i32 = arith.constant 0 : i32
    %c0_i32_0 = arith.constant 0 : i32
    return %arg0, %arg1, %c0_i32 : i32, i32, i32
  }
}

</mosaic_0001>

<llo_original>
// kernel: tpu_custom_call.1
$region0: #{tpu_custom_call.1}
  #allocation0 [shape = 'u32[]', space=smem, size = 0x4, offset = 0x4, fixed_abs, tag = 'smem constant byte address 0x4 - core index']
  #allocation1 [shape = 'u32[144,128]{1,0:T(1,128)}', space=vmem, size = 0x12000, scoped, tag = 'internal scratch']
  %s0 = inlined_call_operand.vmem [shape: f32[2,16,64], index: 0, kind: input, shape index: {}]
  %s1 = inlined_call_operand.vmem [shape: f32[64,32], index: 1, kind: input, shape index: {}]
  %s2 = inlined_call_operand.vmem [shape: f32[1,32], index: 2, kind: input, shape index: {}]
  %s3 = inlined_call_operand.hbm [shape: f32[2,16,32], index: 3, kind: output, shape index: {}]
  %s4 = sld [smem:[#allocation0]]
  $region45: #{tpu_custom_call.1} parent=0
    _
  %s6 = ssub.s32 1, %s4
  %s7 = scalar_select 0, %s6, %s4
  $region1: #{tpu_custom_call.1} parent=0
    #allocation2 [shape = 'u8[16384]{0}', space=vmem, size = 0x4000, scoped, tag = 'output window, operand 0']
    #allocation3 [shape = 's32[2]{0}', space=sflag, size = 0x8, scoped, tag = 'scoped memory for tpu_custom_call.1']
    %8 = vsyncpa [#allocation3], 0
    %s9 = scalar_lea.sflag [#allocation3], 1
    %10 = vsyncpa %s9, 0
    loop: start=0, step=1, limit=4
    $region2: #{tpu_custom_call.1} parent=1 // loop_pre_header
      _
    $region3: #{tpu_custom_call.1} parent=1 // loop_header
      %s12 = sphi 0, %s16
      %p13 = scmp.ge.s32.totalorder %s12, 4
      %s19 = sphi 0, %s31
      %s20 = sphi 0, %s27
      %s21 = sphi 0, %s19
      %s22 = sphi 0, %s20
      %s23 = sphi 0, %s21
      %s24 = sphi 0, %s22
      %s36 = sphi 0, %s38
      %s39 = sphi 0, %s36
      %s40 = sphi 0, %s39
      %s56 = sphi 0, %s40
      %s60 = sphi 0, %s60
      %s62 = sphi 0, %s60
      %s63 = sphi 0, %s62
      %s77 = sphi 0, %s63
      %s81 = sphi 0, %s81
      %s83 = sphi 0, %s81
      %s84 = sphi 0, %s83
      %s98 = sphi 0, %s84
      %s106 = sphi 0, %s108
      %s109 = sphi 0, %s106
      %s110 = sphi 0, %s109
      %s126 = sphi 0, %s110
    $region4: #{tpu_custom_call.1} parent=1 // loop_header_branch
      %15 = sbr.rel (%p13) target = $region8
    $region5: #{tpu_custom_call.1} parent=1 // loop_body
      %s17 = ssub.s32 %s12, 1
      %s18 = ssub.s32 %s12, 2
      %s25 = sadd.s32 1, %s20
      %p26 = scmp.ge.s32.totalorder %s25, 1
      %s27 = scalar_select %p26, 0, %s25
      %s28 = sadd.s32 1, %s19
      %s29 = scalar_select %p26, %s28, %s19
      %p30 = scmp.ge.s32.totalorder %s29, 2
      %s31 = scalar_select %p30, 0, %s29
      %s32 = ssub.s32 %s19, %s31
      %s33 = ssub.s32 %s20, %s27
      %s34 = sor.u32 %s32, %s33
      %p35 = scmp.eq.s32.totalorder %s34, 0
      %s37 = sadd.s32 %s36, 1
      %s38 = scalar_select %p35, %s36, %s37
      %p41 = pneg %p35
      %p42 = scmp.eq.s32.totalorder %s12, 1
      %p43 = por %p41, %p42
      %p44 = scmp.ne.s32.totalorder %s36, %s39
      %p45 = scmp.eq.s32.totalorder %s12, 0
      %p46 = por %p44, %p45
      %p47 = scmp.ne.s32.totalorder %s36, %s39
      %p48 = scmp.eq.s32.totalorder %s17, 1
      %p49 = por %p47, %p48
      %p50 = scmp.ne.s32.totalorder %s39, %s40
      %p51 = scmp.eq.s32.totalorder %s17, 0
      %p52 = por %p50, %p51
      %p53 = scmp.ne.s32.totalorder %s39, %s40
      %p54 = scmp.eq.s32.totalorder %s18, 1
      %p55 = por %p53, %p54
      %p57 = scmp.ne.s32.totalorder %s40, %s56
      %p58 = scmp.eq.s32.totalorder %s18, 0
      %p59 = por %p57, %p58
      %s61 = sadd.s32 %s60, 1
      %p64 = scmp.eq.s32.totalorder %s12, 1
      %p65 = scmp.ne.s32.totalorder %s60, %s62
      %p66 = scmp.eq.s32.totalorder %s12, 0
      %p67 = por %p65, %p66
      %p68 = scmp.ne.s32.totalorder %s60, %s62
      %p69 = scmp.eq.s32.totalorder %s17, 1
      %p70 = por %p68, %p69
      %p71 = scmp.ne.s32.totalorder %s62, %s63
      %p72 = scmp.eq.s32.totalorder %s17, 0
      %p73 = por %p71, %p72
      %p74 = scmp.ne.s32.totalorder %s62, %s63
      %p75 = scmp.eq.s32.totalorder %s18, 1
      %p76 = por %p74, %p75
      %p78 = scmp.ne.s32.totalorder %s63, %s77
      %p79 = scmp.eq.s32.totalorder %s18, 0
      %p80 = por %p78, %p79
      %s82 = sadd.s32 %s81, 1
      %p85 = scmp.eq.s32.totalorder %s12, 1
      %p86 = scmp.ne.s32.totalorder %s81, %s83
      %p87 = scmp.eq.s32.totalorder %s12, 0
      %p88 = por %p86, %p87
      %p89 = scmp.ne.s32.totalorder %s81, %s83
      %p90 = scmp.eq.s32.totalorder %s17, 1
      %p91 = por %p89, %p90
      %p92 = scmp.ne.s32.totalorder %s83, %s84
      %p93 = scmp.eq.s32.totalorder %s17, 0
      %p94 = por %p92, %p93
      %p95 = scmp.ne.s32.totalorder %s83, %s84
      %p96 = scmp.eq.s32.totalorder %s18, 1
      %p97 = por %p95, %p96
      %p99 = scmp.ne.s32.totalorder %s84, %s98
      %p100 = scmp.eq.s32.totalorder %s18, 0
      %p101 = por %p99, %p100
      %s102 = ssub.s32 %s19, %s31
      %s103 = ssub.s32 %s20, %s27
      %s104 = sor.u32 %s102, %s103
      %p105 = scmp.eq.s32.totalorder %s104, 0
      %s107 = sadd.s32 %s106, 1
      %s108 = scalar_select %p105, %s106, %s107
      %p111 = pneg %p105
      %p112 = scmp.eq.s32.totalorder %s12, 1
      %p113 = por %p111, %p112
      %p114 = scmp.ne.s32.totalorder %s106, %s109
      %p115 = scmp.eq.s32.totalorder %s12, 0
      %p116 = por %p114, %p115
      %p117 = scmp.ne.s32.totalorder %s106, %s109
      %p118 = scmp.eq.s32.totalorder %s17, 1
      %p119 = por %p117, %p118
      %p120 = scmp.ne.s32.totalorder %s109, %s110
      %p121 = scmp.eq.s32.totalorder %s17, 0
      %p122 = por %p120, %p121
      %p123 = scmp.ne.s32.totalorder %s109, %s110
      %p124 = scmp.eq.s32.totalorder %s18, 1
      %p125 = por %p123, %p124
      %p127 = scmp.ne.s32.totalorder %s110, %s126
      %p128 = scmp.eq.s32.totalorder %s18, 0
      %p129 = por %p127, %p128
      %p130 = scmp.le.s32.totalorder 1, %s12
      %p131 = scmp.lt.s32.totalorder %s12, 3
      %p132 = pnand %p130, %p131
      %p133 = pneg %p132
      // Predicated region
      $region9: #{tpu_custom_call.1} parent=5 // pred_check
        _
      $region10: #{tpu_custom_call.1} parent=5 // pred_check_branch
        %135 = sbr.rel (%p132) target = $region12
      $region11: #{tpu_custom_call.1} parent=5 // pred_region
        %s136 = ssub.s32 %s12, 1
        // Predicated region
        $region13: #{tpu_custom_call.1} parent=11 // pred_check
          %p137 = pneg %p73
        $region14: #{tpu_custom_call.1} parent=11 // pred_check_branch
          %139 = sbr.rel (%p137) target = $region16
        $region15: #{tpu_custom_call.1} parent=11 // pred_region
          _
        $region16: #{tpu_custom_call.1} parent=11 // pred_fallthru
          _
        // Predicated region
        $region17: #{tpu_custom_call.1} parent=11 // pred_check
          %p140 = pneg %p94
        $region18: #{tpu_custom_call.1} parent=11 // pred_check_branch
          %142 = sbr.rel (%p140) target = $region20
        $region19: #{tpu_custom_call.1} parent=11 // pred_region
          _
        $region20: #{tpu_custom_call.1} parent=11 // pred_fallthru
          _
      $region12: #{tpu_custom_call.1} parent=5 // pred_fallthru
        _
      %p143 = scmp.lt.s32.totalorder %s12, 2
      // Predicated region
      $region21: #{tpu_custom_call.1} parent=5 // pred_check
        %p144 = pneg %p143
      $region22: #{tpu_custom_call.1} parent=5 // pred_check_branch
        %146 = sbr.rel (%p144) target = $region24
      $region23: #{tpu_custom_call.1} parent=5 // pred_region
        // Predicated region
        $region25: #{tpu_custom_call.1} parent=23 // pred_check
          %p147 = pneg %p46
        $region26: #{tpu_custom_call.1} parent=23 // pred_check_branch
          %149 = sbr.rel (%p147) target = $region28
        $region27: #{tpu_custom_call.1} parent=23 // pred_region
          %s150 = smul.u32 2, %s20
          %p151 = scmp.lt.s32.totalorder %s19, 1
          %s152 = scalar_select %p151, %s19, 1
          %p153 = scmp.lt.s32.totalorder %s150, 1
          %s154 = scalar_select %p153, %s150, 1
          %s155 = smul.addr %s152, 2
          %s156 = sadd.s32 %s154, %s155
          %s157 = smul.addr %s156, 8
          %s158 = scalar_lea.vmem %s0, %s157
          %s159 = smul.u32 2, %s20
        $region28: #{tpu_custom_call.1} parent=23 // pred_fallthru
          _
      $region24: #{tpu_custom_call.1} parent=5 // pred_fallthru
        _
      %p160 = scmp.le.s32.totalorder 1, %s12
      %p161 = scmp.lt.s32.totalorder %s12, 3
      %p162 = pnand %p160, %p161
      %p163 = pneg %p162
      // Predicated region
      $region29: #{tpu_custom_call.1} parent=5 // pred_check
        _
      $region30: #{tpu_custom_call.1} parent=5 // pred_check_branch
        %165 = sbr.rel (%p162) target = $region32
      $region31: #{tpu_custom_call.1} parent=5 // pred_region
        %s166 = ssub.s32 %s12, 1
        %s167 = smul.u32 2, %s22
        %p168 = scmp.lt.s32.totalorder %s21, 1
        %s169 = scalar_select %p168, %s21, 1
        %p170 = scmp.lt.s32.totalorder %s167, 1
        %s171 = scalar_select %p170, %s167, 1
        %s172 = smul.addr %s169, 2
        %s173 = sadd.s32 %s171, %s172
        %s174 = smul.addr %s173, 8
        %s175 = scalar_lea.vmem %s0, %s174
        %p176 = pneg %p52
        %p177 = pneg %p49
        %p178 = pneg %p73
        %p179 = pneg %p70
        %p180 = pneg %p94
        %p181 = pneg %p91
        %p182 = pneg %p122
        %p183 = pneg %p119
        %s184 = sand.u32 %s109, 1
        %s185 = scalar_lea.sflag [#allocation3], %s184
        %s186 = sand.u32 %s109, 1
        %s187 = smul.addr %s186, 16
        %s188 = scalar_lea.vmem [#allocation2], %s187
        %s189 = smul.u32 2, %s22
        %p190 = scmp.lt.s32.totalorder %s21, 1
        %s191 = scalar_select %p190, %s21, 1
        %p192 = scmp.lt.s32.totalorder %s189, 1
        %s193 = scalar_select %p192, %s189, 1
        %s194 = smul.addr %s191, 2
        %s195 = sadd.s32 %s193, %s194
        %s196 = smul.addr %s195, 8
        %s197 = scalar_lea.vmem %s0, %s196
        %s198 = smul.u32 2, %s22
        %s199 = smul.u32 2, %s22
        %v200 = vld [vmem:[%s197] sm:$0xff]
        %v201 = vld [vmem:[%s197 + $0x8] sm:$0xff]
        %v202 = vld [vmem:[%s1] sm:$0xff]
        %v203 = vld [vmem:[%s1 + $0x8] sm:$0xff]
        %v204 = vld [vmem:[%s1 + $0x10] sm:$0xff]
        %v205 = vld [vmem:[%s1 + $0x18] sm:$0xff]
        %v206 = vld [vmem:[%s1 + $0x20] sm:$0xff]
        %v207 = vld [vmem:[%s1 + $0x28] sm:$0xff]
        %v208 = vld [vmem:[%s1 + $0x30] sm:$0xff]
        %v209 = vld [vmem:[%s1 + $0x38] sm:$0xff]
        %v210 = vld [vmem:[%s2] sm:$0x1]
        %v212 = vlaneseq
        %v213 = vshrl.u32 %v212, 7
        %v214 = vsub.s32 0, %v213
        %v215 = vrot.slane %v210, %v214
        %vm217 = vcmask 523264
        %v219 = vsel %vm217, %v200, 0
        %v222 = vsel %vm217, %v201, 0
        %224 = vmatprep.subr.mxu0 0.0
        %225 = vmatpush1.msra.mxu0 %v202
        %226 = vmatprep.subr.mxu0 0.0
        %227 = vmatpush1.msra.mxu0 %v203
        %228 = vmatprep.subr.mxu0 0.0
        %229 = vmatpush1.msra.mxu0 %v204
        %230 = vmatprep.subr.mxu0 0.0
        %231 = vmatpush1.msra.mxu0 %v205
        %232 = vmatprep.subr.mxu0 0.0
        %233 = vmatpush1.msra.mxu0 %v206
        %234 = vmatprep.subr.mxu0 0.0
        %235 = vmatpush1.msra.mxu0 %v207
        %236 = vmatprep.subr.mxu0 0.0
        %237 = vmatpush1.msra.mxu0 %v208
        %238 = vmatprep.subr.mxu0 0.0
        %239 = vmatpush1.msra.mxu0 %v209
        %240 = vmatprep.subr.mxu0 0.0
        %241 = vmatpush1.msra.mxu0 0.0
        %242 = vmatprep.subr.mxu0 0.0
        %243 = vmatpush1.msra.mxu0 0.0
        %244 = vmatprep.subr.mxu0 0.0
        %245 = vmatpush1.msra.mxu0 0.0
        %246 = vmatprep.subr.mxu0 0.0
        %247 = vmatpush1.msra.mxu0 0.0
        %248 = vmatprep.subr.mxu0 0.0
        %249 = vmatpush1.msra.mxu0 0.0
        %250 = vmatprep.subr.mxu0 0.0
        %251 = vmatpush1.msra.mxu0 0.0
        %252 = vmatprep.subr.mxu0 0.0
        %253 = vmatpush1.msra.mxu0 0.0
        %254 = vmatprep.subr.mxu0 0.0
        %255 = vmatpush1.msra.mxu0 0.0
        %256 = vmatprep.subr.mxu0 0.0
        %257 = vmatpush1.msra.mxu0 0.0
        %258 = vmatprep.subr.mxu0 0.0
        %259 = vmatpush1.msra.mxu0 0.0
        %260 = vmatprep.subr.mxu0 0.0
        %261 = vmatpush1.msra.mxu0 0.0
        %262 = vmatprep.subr.mxu0 0.0
        %263 = vmatpush1.msra.mxu0 0.0
        %264 = vmatprep.subr.mxu0 0.0
        %265 = vmatpush1.msra.mxu0 0.0
        %266 = vmatprep.subr.mxu0 0.0
        %267 = vmatpush1.msra.mxu0 0.0
        %268 = vmatprep.subr.mxu0 0.0
        %269 = vmatpush1.msra.mxu0 0.0
        %270 = vmatprep.subr.mxu0 0.0
        %271 = vmatpush1.msra.mxu0 0.0
        %272 = vmatprep.subr.mxu0 0.0
        %273 = vmatpush1.msra.mxu0 0.0
        %274 = vmatprep.subr.mxu0 0.0
        %275 = vmatpush1.msra.mxu0 0.0
        %276 = vmatprep.subr.mxu0 0.0
        %277 = vmatpush1.msra.mxu0 0.0
        %278 = vmatprep.subr.mxu0 0.0
        %279 = vmatpush1.msra.mxu0 0.0
        %280 = vmatprep.subr.mxu0 0.0
        %281 = vmatpush1.msra.mxu0 0.0
        %282 = vmatprep.subr.mxu0 0.0
        %283 = vmatpush1.msra.mxu0 0.0
        %284 = vmatprep.subr.mxu0 0.0
        %285 = vmatpush1.msra.mxu0 0.0
        %286 = vmatprep.subr.mxu0 0.0
        %287 = vmatpush1.msra.mxu0 0.0
        %288 = vmatprep.mubr.f32.mxu0 0.0
        %289 = vmatmul.mubr.f32.gmra.mrb[0].mxu0 %v219
        %v290 = vpop.f32.mrb[0].mxu0
        %v291 = vadd.f32 %v215, %v290
        %v292 = vpop.f32.mrb[0].mxu0
        %293 = vmatprep.mubr.f32.mxu0 0.0
        %294 = vmatmul.mubr.f32.gmra.mrb[0].mxu0 %v222
        %v295 = vpop.f32.mrb[0].mxu0
        %v296 = vadd.f32 %v215, %v295
        %v297 = vpop.f32.mrb[0].mxu0
        %298 = vdwg.mxu0
        %vm299 = vcmask 261120
        %300 = vst.msk [vmem:[%s188] sm:$0xff] %vm299, %v291
        %301 = vst.msk [vmem:[%s188 + $0x8] sm:$0xff] %vm299, %v296
        %s302 = sand.u32 %s109, 1
        %s303 = scalar_lea.sflag [#allocation3], %s302
        %s304 = sand.u32 %s109, 1
        %s305 = smul.addr %s304, 16
        %s306 = scalar_lea.vmem [#allocation2], %s305
        // Predicated region
        $region33: #{tpu_custom_call.1} parent=31 // pred_check
          %p307 = pneg %p119
        $region34: #{tpu_custom_call.1} parent=31 // pred_check_branch
          %309 = sbr.rel (%p307) target = $region36
        $region35: #{tpu_custom_call.1} parent=31 // pred_region
          %s310 = smul.u32 2, %s22
          %s312 = ssub.s32 256, 256
          %313 = vsyncadd %s303, %s312
          %s314 = smul.addr %s21, 2
          %s315 = sadd.s32 %s310, %s314
          %s316 = smul.addr %s315, 128
          %s317 = scalar_lea.hbm %s3, %s316
          %s318 = sshll.u32 %s306, 4
          %s319 = int_to_ptr.vmem [resolvable:$true] %s318
          %324 = dma.vmem_to_hbm [thread:$0]  %s319, 256, %s317, %s303, 128, 128, 8
        $region36: #{tpu_custom_call.1} parent=31 // pred_fallthru
          _
      $region32: #{tpu_custom_call.1} parent=5 // pred_fallthru
        _
      %p325 = scmp.le.s32.totalorder 2, %s12
      // Predicated region
      $region37: #{tpu_custom_call.1} parent=5 // pred_check
        %p326 = pneg %p325
      $region38: #{tpu_custom_call.1} parent=5 // pred_check_branch
        %328 = sbr.rel (%p326) target = $region40
      $region39: #{tpu_custom_call.1} parent=5 // pred_region
        %s329 = ssub.s32 %s12, 2
        // Predicated region
        $region41: #{tpu_custom_call.1} parent=39 // pred_check
          %p330 = pneg %p125
        $region42: #{tpu_custom_call.1} parent=39 // pred_check_branch
          %332 = sbr.rel (%p330) target = $region44
        $region43: #{tpu_custom_call.1} parent=39 // pred_region
          %s333 = sand.u32 %s110, 1
          %s334 = scalar_lea.sflag [#allocation3], %s333
          %s335 = sand.u32 %s110, 1
          %s336 = smul.addr %s335, 16
          %s337 = scalar_lea.vmem [#allocation2], %s336
          %338 = dma.done %s334, 256
        $region44: #{tpu_custom_call.1} parent=39 // pred_fallthru
          _
      $region40: #{tpu_custom_call.1} parent=5 // pred_fallthru
        _
    $region6: #{tpu_custom_call.1} parent=1 // loop_footer
      %s16 = sadd.s32 1, %s12
    $region7: #{tpu_custom_call.1} parent=1 // loop_footer_branch
      %11 = sbr.rel target = $region3
    $region8: #{tpu_custom_call.1} parent=1 // loop_exit
      _
    %339 = vsyncpa [#allocation3], 1
    %s340 = scalar_lea.sflag [#allocation3], 1
    %341 = vsyncpa %s340, 1

</llo_original>
